<compile_context>
chip_gen: v7x
topology: tpu7x:2x2x1
jax: 0.10.0
libtpu: 0.0.40
codegen_flags: <defaults>
</compile_context>

<pallas_src>
import functools

import jax
import jax.numpy as jnp
from jax.experimental import pallas as pl
from jax.experimental.pallas import tpu as pltpu

LRELU_SLOPE = 0.2
LANE = 128


def _round_up(x, m):
    return (x + m - 1) // m * m


def _lrelu(x):
    return jnp.where(x > 0, x, LRELU_SLOPE * x)


# ----------------------------- Pallas kernels ------------------------------ #

def _stats_kernel(x_ref, w1_ref, b1_ref, w2_ref, stats_ref, *, hw_true):
    """conv1(+bias)+LeakyReLU -> conv2; emit per-tile BatchNorm partial stats only."""
    t_hw = x_ref.shape[-1]
    x = x_ref[...].astype(jnp.bfloat16)                               # (cin, t_hw)
    h = jnp.dot(w1_ref[...], x, preferred_element_type=jnp.float32)   # (c1p, t_hw)
    h = _lrelu(h + b1_ref[...])
    y2 = jnp.dot(w2_ref[...], h.astype(jnp.bfloat16),
                 preferred_element_type=jnp.float32)                  # (c2p, t_hw)
    # Mask pixel columns that are only HW padding (per image).
    col = jax.lax.broadcasted_iota(jnp.int32, (1, t_hw), 1) + pl.program_id(1) * t_hw
    mask = (col < hw_true).astype(jnp.float32)                        # (1, t_hw)
    ym = y2 * mask
    stats_ref[:, 0:1] = jnp.sum(ym, axis=1, keepdims=True)            # sum
    stats_ref[:, 1:2] = jnp.sum(ym * y2, axis=1, keepdims=True)       # sum of squares


def _fwd_kernel(x_ref, w1_ref, b1_ref, w2_ref, scale_ref, shift_ref, w3_ref, o_ref):
    """Recompute conv1+LReLU+conv2, then fused BN affine + LReLU + final 1x1 conv."""
    x = x_ref[...].astype(jnp.bfloat16)                               # (cin, t_hw)
    h = jnp.dot(w1_ref[...], x, preferred_element_type=jnp.float32)   # (c1p, t_hw)
    h = _lrelu(h + b1_ref[...])
    y2 = jnp.dot(w2_ref[...], h.astype(jnp.bfloat16),
                 preferred_element_type=jnp.float32)                  # (c2p, t_hw)
    z = _lrelu(y2 * scale_ref[...] + shift_ref[...])
    # Final conv has a single output channel: elementwise scale + sublane reduce keeps
    # the (1, t_hw) result lane-dense (no 128x padded HBM write, exact f32).
    o_ref[...] = jnp.sum(z * w3_ref[...], axis=0, keepdims=True)


# ------------------------------- JAX glue ---------------------------------- #

def _conv1x1_to_mat_oc(w_oihw):
    """PyTorch (Cout, Cin, 1, 1) -> (Cout, Cin)."""
    return w_oihw[:, :, 0, 0]


def init_params(key, input_nc, ndf):
    """Deterministic synthetic parameters with the PyTorch module's shapes."""
    k = jax.random.split(key, 4)
    return {
        "w1": 0.02 * jax.random.normal(k[0], (ndf, input_nc, 1, 1), jnp.float32),
        "b1": 0.02 * jax.random.normal(k[1], (ndf,), jnp.float32),
        "w2": 0.02 * jax.random.normal(k[2], (2 * ndf, ndf, 1, 1), jnp.float32),
        "gamma": jnp.ones((2 * ndf,), jnp.float32),   # BatchNorm2d init
        "beta": jnp.zeros((2 * ndf,), jnp.float32),
        "w3": 0.02 * jax.random.normal(k[3], (1, 2 * ndf, 1, 1), jnp.float32),
    }


def pixel_discriminator_forward(x_nchw, params, *, bn_eps=1e-5, tile_hw=2048):
    n, cin, hh, ww = x_nchw.shape
    hw = hh * ww
    c1 = params["w1"].shape[0]
    c2 = params["w2"].shape[0]
    c1p = _round_up(c1, LANE)
    c2p = _round_up(c2, LANE)

    # Pixel-tile size: big tiles for HBM efficiency, but keep >=2 grid steps when the
    # batch dim alone can't feed both v7x TensorCores.
    t_hw = min(tile_hw, _round_up(hw, LANE))
    if n == 1:
        t_hw = min(t_hw, max(LANE, _round_up(_round_up(hw, LANE) // 2, LANE)))
    hw_p = _round_up(hw, t_hw)
    grid = (n, hw_p // t_hw)

    # Channels-on-sublanes / pixels-on-lanes: NCHW -> (N, Cin, HW) is a free reshape.
    x3 = x_nchw.reshape(n, cin, hw).astype(jnp.float32)
    if hw_p != hw:
        x3 = jnp.pad(x3, ((0, 0), (0, 0), (0, hw_p - hw)))

    # Weight prep (zero padding keeps padded channels inert); bf16 once, here.
    w1p = jnp.pad(_conv1x1_to_mat_oc(params["w1"]),
                  ((0, c1p - c1), (0, 0))).astype(jnp.bfloat16)        # (c1p, cin)
    b1p = jnp.pad(params["b1"], (0, c1p - c1))[:, None]                # (c1p, 1) f32
    w2p = jnp.pad(_conv1x1_to_mat_oc(params["w2"]),
                  ((0, c2p - c2), (0, c1p - c1))).astype(jnp.bfloat16)  # (c2p, c1p)
    w3p = jnp.pad(_conv1x1_to_mat_oc(params["w3"]).T,
                  ((0, c2p - c2), (0, 0))).astype(jnp.float32)          # (c2p, 1)
    gamma = jnp.pad(params["gamma"], (0, c2p - c2))
    beta = jnp.pad(params["beta"], (0, c2p - c2))

    x_spec = pl.BlockSpec((None, cin, t_hw), lambda b, t: (b, 0, t))
    w1_spec = pl.BlockSpec((c1p, cin), lambda b, t: (0, 0))
    b1_spec = pl.BlockSpec((c1p, 1), lambda b, t: (0, 0))
    w2_spec = pl.BlockSpec((c2p, c1p), lambda b, t: (0, 0))
    vec_spec = pl.BlockSpec((c2p, 1), lambda b, t: (0, 0))
    parallel = pltpu.CompilerParams(dimension_semantics=("parallel", "parallel"))

    # Pass 1: BatchNorm partial statistics only (no activation round-trip via HBM).
    stats = pl.pallas_call(
        functools.partial(_stats_kernel, hw_true=hw),
        out_shape=jax.ShapeDtypeStruct((n, hw_p // t_hw, c2p, 2), jnp.float32),
        grid=grid,
        in_specs=[x_spec, w1_spec, b1_spec, w2_spec],
        out_specs=pl.BlockSpec((None, None, c2p, 2), lambda b, t: (b, t, 0, 0)),
        compiler_params=parallel,
    )(x3, w1p, b1p, w2p)

    # Tiny per-channel reduction -> training-mode batch statistics (biased variance),
    # matching a freshly-constructed nn.BatchNorm2d called in train().
    # TODO(synk): eval()-mode BatchNorm (running_mean/running_var) would replace this
    # stats pass with a fixed scale/shift.
    m_true = n * hw
    tot = jnp.sum(stats, axis=(0, 1))                                  # (c2p, 2)
    mean = tot[:, 0] / m_true
    var = jnp.maximum(tot[:, 1] / m_true - mean * mean, 0.0)
    scale = gamma / jnp.sqrt(var + bn_eps)
    shift = beta - mean * scale

    # Pass 2: recompute conv1+LReLU+conv2 (cheap at Cin=3) and fuse BN + LReLU + conv3.
    out = pl.pallas_call(
        _fwd_kernel,
        out_shape=jax.ShapeDtypeStruct((n, 1, hw_p), jnp.float32),
        grid=grid,
        in_specs=[x_spec, w1_spec, b1_spec, w2_spec, vec_spec, vec_spec, vec_spec],
        out_specs=pl.BlockSpec((None, 1, t_hw), lambda b, t: (b, 0, t)),
        compiler_params=parallel,
    )(x3, w1p, b1p, w2p,
      scale[:, None].astype(jnp.float32), shift[:, None].astype(jnp.float32), w3p)

    return out[:, :, :hw].reshape(n, 1, hh, ww)                        # NCHW (N,1,H,W)


# Pure-JAX f32 reference (same training-mode BN semantics) for a tolerance check.
def _reference_forward(x_nchw, params, bn_eps=1e-5):
    w1 = params["w1"][:, :, 0, 0]
    h = jnp.einsum("oc,nchw->nohw", w1, x_nchw) + params["b1"][None, :, None, None]
    h = jnp.where(h > 0, h, LRELU_SLOPE * h)
    y = jnp.einsum("oc,nchw->nohw", params["w2"][:, :, 0, 0], h)
    mean = jnp.mean(y, axis=(0, 2, 3), keepdims=True)
    var = jnp.mean((y - mean) ** 2, axis=(0, 2, 3), keepdims=True)
    z = (y - mean) / jnp.sqrt(var + bn_eps)
    z = z * params["gamma"][None, :, None, None] + params["beta"][None, :, None, None]
    z = jnp.where(z > 0, z, LRELU_SLOPE * z)
    return jnp.einsum("oc,nchw->nohw", params["w3"][:, :, 0, 0], z)


# --------------------------------- main ------------------------------------ #

if __name__ == "__main__":
    key = jax.random.PRNGKey(0)
    k_x, k_p = jax.random.split(key)

    batch, input_nc, spatial, ndf = 2, 3, 16, 8
    x = jax.random.normal(k_x, (batch, input_nc, spatial, spatial), jnp.float32)
    params = init_params(k_p, input_nc, ndf)

    out = pixel_discriminator_forward(x, params)
    out = jax.block_until_ready(out)

    assert out.shape == (batch, 1, spatial, spatial), out.shape
    assert bool(jnp.all(jnp.isfinite(out))), "non-finite output"

    ref = _reference_forward(x, params)
    max_err = float(jnp.max(jnp.abs(out - ref)))
    assert max_err < 5e-2, f"mismatch vs f32 reference: max abs err {max_err}"

    print("KERNEL_OK")
</pallas_src>

<mosaic_0001>
module attributes {stable_mosaic.version = 11 : i64} {
  func.func @_stats_kernel(%arg0: i32, %arg1: i32, %arg2: memref<1x3x256xf32, #tpu.memory_space<vmem>>, %arg3: memref<128x3xbf16, #tpu.memory_space<vmem>>, %arg4: memref<128x1xf32, #tpu.memory_space<vmem>>, %arg5: memref<128x128xbf16, #tpu.memory_space<vmem>>, %arg6: memref<1x1x128x2xf32, #tpu.memory_space<vmem>>) attributes {dimension_semantics = [#tpu.dimension_semantics<parallel>, #tpu.dimension_semantics<parallel>], iteration_bounds = array<i64: 2, 1>, scalar_prefetch = 0 : i64, scratch_operands = 0 : i64, tpu.core_type = #tpu.core_type<tc>, window_params = [{transform_indices = @transform_0, window_bounds = array<i64: 1, 3, 256>}, {pipeline_mode = #tpu.pipeline_mode<synchronous>, transform_indices = @transform_1, window_bounds = array<i64: 128, 3>}, {pipeline_mode = #tpu.pipeline_mode<synchronous>, transform_indices = @transform_2, window_bounds = array<i64: 128, 1>}, {pipeline_mode = #tpu.pipeline_mode<synchronous>, transform_indices = @transform_3, window_bounds = array<i64: 128, 128>}, {transform_indices = @transform_4, window_bounds = array<i64: 1, 1, 128, 2>}]} {
    %c0 = arith.constant 0 : index
    %c0_0 = arith.constant 0 : index
    %c0_1 = arith.constant 0 : index
    %0 = vector.load %arg2[%c0, %c0_0, %c0_1] : memref<1x3x256xf32, #tpu.memory_space<vmem>>, vector<1x3x256xf32>
    %1 = vector.shape_cast %0 : vector<1x3x256xf32> to vector<3x256xf32>
    %2 = arith.truncf %1 : vector<3x256xf32> to vector<3x256xbf16>
    %c0_2 = arith.constant 0 : index
    %c0_3 = arith.constant 0 : index
    %3 = vector.load %arg3[%c0_2, %c0_3] : memref<128x3xbf16, #tpu.memory_space<vmem>>, vector<128x3xbf16>
    %cst = arith.constant dense<0.000000e+00> : vector<128x256xf32>
    %4 = tpu.matmul %3, %2, %cst {dimension_numbers = #tpu.dot_dimension_numbers<[1], [0], [0], [1], [0, 0, 1, 1], [], []>} : vector<128x3xbf16>, vector<3x256xbf16>, vector<128x256xf32> -> vector<128x256xf32>
    %c0_4 = arith.constant 0 : index
    %c0_5 = arith.constant 0 : index
    %5 = vector.load %arg4[%c0_4, %c0_5] : memref<128x1xf32, #tpu.memory_space<vmem>>, vector<128x1xf32>
    %6 = vector.broadcast %5 : vector<128x1xf32> to vector<128x256xf32>
    %7 = arith.addf %4, %6 : vector<128x256xf32>
    %cst_6 = arith.constant 0.000000e+00 : f32
    %8 = vector.broadcast %cst_6 : f32 to vector<128x256xf32>
    %9 = arith.cmpf ogt, %7, %8 : vector<128x256xf32>
    %cst_7 = arith.constant 2.000000e-01 : f32
    %10 = vector.broadcast %cst_7 : f32 to vector<128x256xf32>
    %11 = arith.mulf %10, %7 : vector<128x256xf32>
    %12 = arith.select %9, %7, %11 : vector<128x256xi1>, vector<128x256xf32>
    %c0_8 = arith.constant 0 : index
    %c0_9 = arith.constant 0 : index
    %13 = vector.load %arg5[%c0_8, %c0_9] : memref<128x128xbf16, #tpu.memory_space<vmem>>, vector<128x128xbf16>
    %14 = arith.truncf %12 : vector<128x256xf32> to vector<128x256xbf16>
    %cst_10 = arith.constant dense<0.000000e+00> : vector<128x256xf32>
    %15 = tpu.matmul %13, %14, %cst_10 {dimension_numbers = #tpu.dot_dimension_numbers<[1], [0], [0], [1], [0, 0, 1, 1], [], []>} : vector<128x128xbf16>, vector<128x256xbf16>, vector<128x256xf32> -> vector<128x256xf32>
    %16 = tpu.iota {dimensions = array<i32: 1>} : vector<1x256xi32>
    %c256_i32 = arith.constant 256 : i32
    %17 = arith.muli %arg1, %c256_i32 : i32
    %18 = vector.broadcast %17 : i32 to vector<1x256xi32>
    %19 = arith.addi %16, %18 : vector<1x256xi32>
    %c256_i32_11 = arith.constant 256 : i32
    %20 = vector.broadcast %c256_i32_11 : i32 to vector<1x256xi32>
    %21 = arith.cmpi slt, %19, %20 : vector<1x256xi32>
    %22 = arith.extui %21 : vector<1x256xi1> to vector<1x256xi32>
    %23 = arith.sitofp %22 : vector<1x256xi32> to vector<1x256xf32>
    %24 = vector.broadcast %23 : vector<1x256xf32> to vector<128x256xf32>
    %25 = arith.mulf %15, %24 : vector<128x256xf32>
    %cst_12 = arith.constant dense<0.000000e+00> : vector<128xf32>
    %26 = vector.multi_reduction <add>, %25, %cst_12 [1] : vector<128x256xf32> to vector<128xf32>
    %27 = vector.shape_cast %26 : vector<128xf32> to vector<128x1xf32>
    %c0_13 = arith.constant 0 : index
    %c0_14 = arith.constant 0 : index
    %c0_15 = arith.constant 0 : index
    %c0_16 = arith.constant 0 : index
    %28 = vector.load %arg6[%c0_13, %c0_14, %c0_15, %c0_16] : memref<1x1x128x2xf32, #tpu.memory_space<vmem>>, vector<1x1x128x1xf32>
    %29 = vector.shape_cast %28 : vector<1x1x128x1xf32> to vector<128x1xf32>
    %30 = vector.shape_cast %27 : vector<128x1xf32> to vector<1x1x128x1xf32>
    tpu.vector_store %arg6[%c0_13, %c0_14, %c0_15, %c0_16], %30 {strides = array<i32>} : memref<1x1x128x2xf32, #tpu.memory_space<vmem>>, vector<1x1x128x1xf32>,
    %31 = arith.mulf %25, %15 : vector<128x256xf32>
    %cst_17 = arith.constant dense<0.000000e+00> : vector<128xf32>
    %32 = vector.multi_reduction <add>, %31, %cst_17 [1] : vector<128x256xf32> to vector<128xf32>
    %33 = vector.shape_cast %32 : vector<128xf32> to vector<128x1xf32>
    %c0_18 = arith.constant 0 : index
    %c0_19 = arith.constant 0 : index
    %c0_20 = arith.constant 0 : index
    %c1 = arith.constant 1 : index
    %34 = vector.load %arg6[%c0_18, %c0_19, %c0_20, %c1] : memref<1x1x128x2xf32, #tpu.memory_space<vmem>>, vector<1x1x128x1xf32>
    %35 = vector.shape_cast %34 : vector<1x1x128x1xf32> to vector<128x1xf32>
    %36 = vector.shape_cast %33 : vector<128x1xf32> to vector<1x1x128x1xf32>
    tpu.vector_store %arg6[%c0_18, %c0_19, %c0_20, %c1], %36 {strides = array<i32>} : memref<1x1x128x2xf32, #tpu.memory_space<vmem>>, vector<1x1x128x1xf32>,
    return
  }
  func.func @transform_0(%arg0: i32, %arg1: i32) -> (i32, i32, i32) {
    %c0_i32 = arith.constant 0 : i32
    %c0_i32_0 = arith.constant 0 : i32
    return %arg0, %c0_i32, %arg1 : i32, i32, i32
  }
  func.func @transform_1(%arg0: i32, %arg1: i32) -> (i32, i32) {
    %c0_i32 = arith.constant 0 : i32
    %c0_i32_0 = arith.constant 0 : i32
    %c0_i32_1 = arith.constant 0 : i32
    return %c0_i32, %c0_i32_0 : i32, i32
  }
  func.func @transform_2(%arg0: i32, %arg1: i32) -> (i32, i32) {
    %c0_i32 = arith.constant 0 : i32
    %c0_i32_0 = arith.constant 0 : i32
    %c0_i32_1 = arith.constant 0 : i32
    return %c0_i32, %c0_i32_0 : i32, i32
  }
  func.func @transform_3(%arg0: i32, %arg1: i32) -> (i32, i32) {
    %c0_i32 = arith.constant 0 : i32
    %c0_i32_0 = arith.constant 0 : i32
    %c0_i32_1 = arith.constant 0 : i32
    return %c0_i32, %c0_i32_0 : i32, i32
  }
  func.func @transform_4(%arg0: i32, %arg1: i32) -> (i32, i32, i32, i32) {
    %c0_i32 = arith.constant 0 : i32
    %c0_i32_0 = arith.constant 0 : i32
    %c0_i32_1 = arith.constant 0 : i32
    return %arg0, %arg1, %c0_i32, %c0_i32_0 : i32, i32, i32, i32
  }
}

</mosaic_0001>

<llo_original>
// kernel: tpu_custom_call.1
$region0: #{tpu_custom_call.1}
  #allocation0 [shape = 'u32[]', space=smem, size = 0x4, offset = 0x4, fixed_abs, tag = 'smem constant byte address 0x4 - core index']
  #allocation1 [shape = 'u32[144,128]{1,0:T(1,128)}', space=vmem, size = 0x12000, scoped, tag = 'internal scratch']
  %s0 = inlined_call_operand.vmem [shape: f32[2,3,256], index: 0, kind: input, shape index: {}]
  %s1 = inlined_call_operand.vmem [shape: bf16[128,3], index: 1, kind: input, shape index: {}]
  %s2 = inlined_call_operand.vmem [shape: f32[128,1], index: 2, kind: input, shape index: {}]
  %s3 = inlined_call_operand.vmem [shape: bf16[128,128], index: 3, kind: input, shape index: {}]
  %s4 = inlined_call_operand.vmem [shape: f32[2,1,128,2], index: 4, kind: output, shape index: {}]
  %s5 = sld [smem:[#allocation0]]
  $region49: #{tpu_custom_call.1} parent=0
    _
  %s7 = ssub.s32 1, %s5
  %s8 = scalar_select 0, %s7, %s5
  loop: start=0, step=1, limit=4
  $region2: #{tpu_custom_call.1} parent=0 // loop_pre_header
    _
  $region3: #{tpu_custom_call.1} parent=0 // loop_header
    %s10 = sphi 0, %s14
    %p11 = scmp.ge.s32.totalorder %s10, 4
    %s17 = sphi 0, %s29
    %s18 = sphi 0, %s25
    %s19 = sphi 0, %s17
    %s20 = sphi 0, %s18
    %s21 = sphi 0, %s19
    %s22 = sphi 0, %s20
    %s34 = sphi 0, %s36
    %s37 = sphi 0, %s34
    %s38 = sphi 0, %s37
    %s54 = sphi 0, %s38
    %s58 = sphi 0, %s58
    %s60 = sphi 0, %s58
    %s61 = sphi 0, %s60
    %s75 = sphi 0, %s61
    %s79 = sphi 0, %s79
    %s81 = sphi 0, %s79
    %s82 = sphi 0, %s81
    %s96 = sphi 0, %s82
    %s100 = sphi 0, %s100
    %s102 = sphi 0, %s100
    %s103 = sphi 0, %s102
    %s117 = sphi 0, %s103
    %s125 = sphi 0, %s127
    %s128 = sphi 0, %s125
    %s129 = sphi 0, %s128
    %s145 = sphi 0, %s129
  $region4: #{tpu_custom_call.1} parent=0 // loop_header_branch
    %13 = sbr.rel (%p11) target = $region8
  $region5: #{tpu_custom_call.1} parent=0 // loop_body
    %s15 = ssub.s32 %s10, 1
    %s16 = ssub.s32 %s10, 2
    %s23 = sadd.s32 1, %s18
    %p24 = scmp.ge.s32.totalorder %s23, 1
    %s25 = scalar_select %p24, 0, %s23
    %s26 = sadd.s32 1, %s17
    %s27 = scalar_select %p24, %s26, %s17
    %p28 = scmp.ge.s32.totalorder %s27, 2
    %s29 = scalar_select %p28, 0, %s27
    %s30 = ssub.s32 %s17, %s29
    %s31 = ssub.s32 %s18, %s25
    %s32 = sor.u32 %s30, %s31
    %p33 = scmp.eq.s32.totalorder %s32, 0
    %s35 = sadd.s32 %s34, 1
    %s36 = scalar_select %p33, %s34, %s35
    %p39 = pneg %p33
    %p40 = scmp.eq.s32.totalorder %s10, 1
    %p41 = por %p39, %p40
    %p42 = scmp.ne.s32.totalorder %s34, %s37
    %p43 = scmp.eq.s32.totalorder %s10, 0
    %p44 = por %p42, %p43
    %p45 = scmp.ne.s32.totalorder %s34, %s37
    %p46 = scmp.eq.s32.totalorder %s15, 1
    %p47 = por %p45, %p46
    %p48 = scmp.ne.s32.totalorder %s37, %s38
    %p49 = scmp.eq.s32.totalorder %s15, 0
    %p50 = por %p48, %p49
    %p51 = scmp.ne.s32.totalorder %s37, %s38
    %p52 = scmp.eq.s32.totalorder %s16, 1
    %p53 = por %p51, %p52
    %p55 = scmp.ne.s32.totalorder %s38, %s54
    %p56 = scmp.eq.s32.totalorder %s16, 0
    %p57 = por %p55, %p56
    %s59 = sadd.s32 %s58, 1
    %p62 = scmp.eq.s32.totalorder %s10, 1
    %p63 = scmp.ne.s32.totalorder %s58, %s60
    %p64 = scmp.eq.s32.totalorder %s10, 0
    %p65 = por %p63, %p64
    %p66 = scmp.ne.s32.totalorder %s58, %s60
    %p67 = scmp.eq.s32.totalorder %s15, 1
    %p68 = por %p66, %p67
    %p69 = scmp.ne.s32.totalorder %s60, %s61
    %p70 = scmp.eq.s32.totalorder %s15, 0
    %p71 = por %p69, %p70
    %p72 = scmp.ne.s32.totalorder %s60, %s61
    %p73 = scmp.eq.s32.totalorder %s16, 1
    %p74 = por %p72, %p73
    %p76 = scmp.ne.s32.totalorder %s61, %s75
    %p77 = scmp.eq.s32.totalorder %s16, 0
    %p78 = por %p76, %p77
    %s80 = sadd.s32 %s79, 1
    %p83 = scmp.eq.s32.totalorder %s10, 1
    %p84 = scmp.ne.s32.totalorder %s79, %s81
    %p85 = scmp.eq.s32.totalorder %s10, 0
    %p86 = por %p84, %p85
    %p87 = scmp.ne.s32.totalorder %s79, %s81
    %p88 = scmp.eq.s32.totalorder %s15, 1
    %p89 = por %p87, %p88
    %p90 = scmp.ne.s32.totalorder %s81, %s82
    %p91 = scmp.eq.s32.totalorder %s15, 0
    %p92 = por %p90, %p91
    %p93 = scmp.ne.s32.totalorder %s81, %s82
    %p94 = scmp.eq.s32.totalorder %s16, 1
    %p95 = por %p93, %p94
    %p97 = scmp.ne.s32.totalorder %s82, %s96
    %p98 = scmp.eq.s32.totalorder %s16, 0
    %p99 = por %p97, %p98
    %s101 = sadd.s32 %s100, 1
    %p104 = scmp.eq.s32.totalorder %s10, 1
    %p105 = scmp.ne.s32.totalorder %s100, %s102
    %p106 = scmp.eq.s32.totalorder %s10, 0
    %p107 = por %p105, %p106
    %p108 = scmp.ne.s32.totalorder %s100, %s102
    %p109 = scmp.eq.s32.totalorder %s15, 1
    %p110 = por %p108, %p109
    %p111 = scmp.ne.s32.totalorder %s102, %s103
    %p112 = scmp.eq.s32.totalorder %s15, 0
    %p113 = por %p111, %p112
    %p114 = scmp.ne.s32.totalorder %s102, %s103
    %p115 = scmp.eq.s32.totalorder %s16, 1
    %p116 = por %p114, %p115
    %p118 = scmp.ne.s32.totalorder %s103, %s117
    %p119 = scmp.eq.s32.totalorder %s16, 0
    %p120 = por %p118, %p119
    %s121 = ssub.s32 %s17, %s29
    %s122 = ssub.s32 %s18, %s25
    %s123 = sor.u32 %s121, %s122
    %p124 = scmp.eq.s32.totalorder %s123, 0
    %s126 = sadd.s32 %s125, 1
    %s127 = scalar_select %p124, %s125, %s126
    %p130 = pneg %p124
    %p131 = scmp.eq.s32.totalorder %s10, 1
    %p132 = por %p130, %p131
    %p133 = scmp.ne.s32.totalorder %s125, %s128
    %p134 = scmp.eq.s32.totalorder %s10, 0
    %p135 = por %p133, %p134
    %p136 = scmp.ne.s32.totalorder %s125, %s128
    %p137 = scmp.eq.s32.totalorder %s15, 1
    %p138 = por %p136, %p137
    %p139 = scmp.ne.s32.totalorder %s128, %s129
    %p140 = scmp.eq.s32.totalorder %s15, 0
    %p141 = por %p139, %p140
    %p142 = scmp.ne.s32.totalorder %s128, %s129
    %p143 = scmp.eq.s32.totalorder %s16, 1
    %p144 = por %p142, %p143
    %p146 = scmp.ne.s32.totalorder %s129, %s145
    %p147 = scmp.eq.s32.totalorder %s16, 0
    %p148 = por %p146, %p147
    %p149 = scmp.le.s32.totalorder 1, %s10
    %p150 = scmp.lt.s32.totalorder %s10, 3
    %p151 = pnand %p149, %p150
    %p152 = pneg %p151
    // Predicated region
    $region9: #{tpu_custom_call.1} parent=5 // pred_check
      _
    $region10: #{tpu_custom_call.1} parent=5 // pred_check_branch
      %154 = sbr.rel (%p151) target = $region12
    $region11: #{tpu_custom_call.1} parent=5 // pred_region
      %s155 = ssub.s32 %s10, 1
      // Predicated region
      $region13: #{tpu_custom_call.1} parent=11 // pred_check
        %p156 = pneg %p71
      $region14: #{tpu_custom_call.1} parent=11 // pred_check_branch
        %158 = sbr.rel (%p156) target = $region16
      $region15: #{tpu_custom_call.1} parent=11 // pred_region
        _
      $region16: #{tpu_custom_call.1} parent=11 // pred_fallthru
        _
      // Predicated region
      $region17: #{tpu_custom_call.1} parent=11 // pred_check
        %p159 = pneg %p92
      $region18: #{tpu_custom_call.1} parent=11 // pred_check_branch
        %161 = sbr.rel (%p159) target = $region20
      $region19: #{tpu_custom_call.1} parent=11 // pred_region
        _
      $region20: #{tpu_custom_call.1} parent=11 // pred_fallthru
        _
      // Predicated region
      $region21: #{tpu_custom_call.1} parent=11 // pred_check
        %p162 = pneg %p113
      $region22: #{tpu_custom_call.1} parent=11 // pred_check_branch
        %164 = sbr.rel (%p162) target = $region24
      $region23: #{tpu_custom_call.1} parent=11 // pred_region
        _
      $region24: #{tpu_custom_call.1} parent=11 // pred_fallthru
        _
    $region12: #{tpu_custom_call.1} parent=5 // pred_fallthru
      _
    %p165 = scmp.lt.s32.totalorder %s10, 2
    // Predicated region
    $region25: #{tpu_custom_call.1} parent=5 // pred_check
      %p166 = pneg %p165
    $region26: #{tpu_custom_call.1} parent=5 // pred_check_branch
      %168 = sbr.rel (%p166) target = $region28
    $region27: #{tpu_custom_call.1} parent=5 // pred_region
      // Predicated region
      $region29: #{tpu_custom_call.1} parent=27 // pred_check
        %p169 = pneg %p44
      $region30: #{tpu_custom_call.1} parent=27 // pred_check_branch
        %171 = sbr.rel (%p169) target = $region32
      $region31: #{tpu_custom_call.1} parent=27 // pred_region
        %s172 = smul.u32 2, %s18
        %p173 = scmp.lt.s32.totalorder %s17, 1
        %s174 = scalar_select %p173, %s17, 1
        %p175 = scmp.lt.s32.totalorder %s172, 1
        %s176 = scalar_select %p175, %s172, 1
        %s177 = smul.addr %s174, 2
        %s178 = sadd.s32 %s176, %s177
        %s179 = smul.addr %s178, 4
        %s180 = scalar_lea.vmem %s0, %s179
        %s181 = smul.u32 2, %s18
      $region32: #{tpu_custom_call.1} parent=27 // pred_fallthru
        _
    $region28: #{tpu_custom_call.1} parent=5 // pred_fallthru
      _
    %p182 = scmp.le.s32.totalorder 1, %s10
    %p183 = scmp.lt.s32.totalorder %s10, 3
    %p184 = pnand %p182, %p183
    %p185 = pneg %p184
    // Predicated region
    $region33: #{tpu_custom_call.1} parent=5 // pred_check
      _
    $region34: #{tpu_custom_call.1} parent=5 // pred_check_branch
      %187 = sbr.rel (%p184) target = $region36
    $region35: #{tpu_custom_call.1} parent=5 // pred_region
      %s188 = ssub.s32 %s10, 1
      %s189 = smul.u32 2, %s20
      %p190 = scmp.lt.s32.totalorder %s19, 1
      %s191 = scalar_select %p190, %s19, 1
      %p192 = scmp.lt.s32.totalorder %s189, 1
      %s193 = scalar_select %p192, %s189, 1
      %s194 = smul.addr %s191, 2
      %s195 = sadd.s32 %s193, %s194
      %s196 = smul.addr %s195, 4
      %s197 = scalar_lea.vmem %s0, %s196
      %p198 = pneg %p50
      %p199 = pneg %p47
      %p200 = pneg %p71
      %p201 = pneg %p68
      %p202 = pneg %p92
      %p203 = pneg %p89
      %p204 = pneg %p113
      %p205 = pneg %p110
      %p206 = pneg %p141
      %p207 = pneg %p138
      %p208 = scmp.lt.s32.totalorder %s19, 1
      %s209 = scalar_select %p208, %s19, 1
      %p210 = scmp.lt.s32.totalorder %s20, 0
      %s211 = scalar_select %p210, %s20, 0
      %s212 = smul.addr %s211, 16
      %s213 = smul.addr %s209, 16
      %s214 = sadd.s32 %s212, %s213
      %s215 = smul.addr %s214, 8
      %s216 = scalar_lea.vmem %s4, %s215
      %s217 = smul.u32 2, %s20
      %p218 = scmp.lt.s32.totalorder %s19, 1
      %s219 = scalar_select %p218, %s19, 1
      %p220 = scmp.lt.s32.totalorder %s217, 1
      %s221 = scalar_select %p220, %s217, 1
      %s222 = smul.addr %s219, 2
      %s223 = sadd.s32 %s221, %s222
      %s224 = smul.addr %s223, 4
      %s225 = scalar_lea.vmem %s0, %s224
      %s226 = smul.u32 2, %s20
      %p227 = scmp.lt.s32.totalorder %s19, 1
      %s228 = scalar_select %p227, %s19, 1
      %p229 = scmp.lt.s32.totalorder %s20, 0
      %s230 = scalar_select %p229, %s20, 0
      %s231 = smul.addr %s230, 16
      %s232 = smul.addr %s228, 16
      %s233 = sadd.s32 %s231, %s232
      %s234 = smul.addr %s233, 8
      %s235 = scalar_lea.vmem %s4, %s234
      %v237 = vld [vmem:[%s225] sm:$0x77]
      %v239 = vcombine.high %v237, %v237
      %v241 = vpack.c.bf16 %v237, %v237
      %v242 = vpack.c.bf16 %v239, %v239
      %v243 = vld [vmem:[%s1] sm:$0xf]
      %v244 = vld [vmem:[%s1 + $0x4] sm:$0xf]
      %v245 = vld [vmem:[%s1 + $0x8] sm:$0xf]
      %v246 = vld [vmem:[%s1 + $0xc] sm:$0xf]
      %v247 = vld [vmem:[%s1 + $0x10] sm:$0xf]
      %v248 = vld [vmem:[%s1 + $0x14] sm:$0xf]
      %v249 = vld [vmem:[%s1 + $0x18] sm:$0xf]
      %v250 = vld [vmem:[%s1 + $0x1c] sm:$0xf]
      %v251 = vld [vmem:[%s1 + $0x20] sm:$0xf]
      %v252 = vld [vmem:[%s1 + $0x24] sm:$0xf]
      %v253 = vld [vmem:[%s1 + $0x28] sm:$0xf]
      %v254 = vld [vmem:[%s1 + $0x2c] sm:$0xf]
      %v255 = vld [vmem:[%s1 + $0x30] sm:$0xf]
      %v256 = vld [vmem:[%s1 + $0x34] sm:$0xf]
      %v257 = vld [vmem:[%s1 + $0x38] sm:$0xf]
      %v258 = vld [vmem:[%s1 + $0x3c] sm:$0xf]
      %v259 = vld [vmem:[%s2] sm:$0xff]
      %v260 = vld [vmem:[%s2 + $0x8] sm:$0xff]
      %v261 = vld [vmem:[%s2 + $0x10] sm:$0xff]
      %v262 = vld [vmem:[%s2 + $0x18] sm:$0xff]
      %v263 = vld [vmem:[%s2 + $0x20] sm:$0xff]
      %v264 = vld [vmem:[%s2 + $0x28] sm:$0xff]
      %v265 = vld [vmem:[%s2 + $0x30] sm:$0xff]
      %v266 = vld [vmem:[%s2 + $0x38] sm:$0xff]
      %v267 = vld [vmem:[%s2 + $0x40] sm:$0xff]
      %v268 = vld [vmem:[%s2 + $0x48] sm:$0xff]
      %v269 = vld [vmem:[%s2 + $0x50] sm:$0xff]
      %v270 = vld [vmem:[%s2 + $0x58] sm:$0xff]
      %v271 = vld [vmem:[%s2 + $0x60] sm:$0xff]
      %v272 = vld [vmem:[%s2 + $0x68] sm:$0xff]
      %v273 = vld [vmem:[%s2 + $0x70] sm:$0xff]
      %v274 = vld [vmem:[%s2 + $0x78] sm:$0xff]
      %276 = vset.pattern.permute.xlu0 0
      %277 = vperm.xlu0 %276, %v259
      %v278 = vpop.permute.xlu0 %277
      %281 = vset.pattern.permute.xlu0 0
      %282 = vperm.xlu0 %281, %v260
      %v283 = vpop.permute.xlu0 %282
      %286 = vset.pattern.permute.xlu0 0
      %287 = vperm.xlu0 %286, %v261
      %v288 = vpop.permute.xlu0 %287
      %291 = vset.pattern.permute.xlu0 0
      %292 = vperm.xlu0 %291, %v262
      %v293 = vpop.permute.xlu0 %292
      %296 = vset.pattern.permute.xlu0 0
      %297 = vperm.xlu0 %296, %v263
      %v298 = vpop.permute.xlu0 %297
      %301 = vset.pattern.permute.xlu0 0
      %302 = vperm.xlu0 %301, %v264
      %v303 = vpop.permute.xlu0 %302
      %306 = vset.pattern.permute.xlu0 0
      %307 = vperm.xlu0 %306, %v265
      %v308 = vpop.permute.xlu0 %307
      %311 = vset.pattern.permute.xlu0 0
      %312 = vperm.xlu0 %311, %v266
      %v313 = vpop.permute.xlu0 %312
      %316 = vset.pattern.permute.xlu0 0
      %317 = vperm.xlu0 %316, %v267
      %v318 = vpop.permute.xlu0 %317
      %321 = vset.pattern.permute.xlu0 0
      %322 = vperm.xlu0 %321, %v268
      %v323 = vpop.permute.xlu0 %322
      %326 = vset.pattern.permute.xlu0 0
      %327 = vperm.xlu0 %326, %v269
      %v328 = vpop.permute.xlu0 %327
      %331 = vset.pattern.permute.xlu0 0
      %332 = vperm.xlu0 %331, %v270
      %v333 = vpop.permute.xlu0 %332
      %336 = vset.pattern.permute.xlu0 0
      %337 = vperm.xlu0 %336, %v271
      %v338 = vpop.permute.xlu0 %337
      %341 = vset.pattern.permute.xlu0 0
      %342 = vperm.xlu0 %341, %v272
      %v343 = vpop.permute.xlu0 %342
      %346 = vset.pattern.permute.xlu0 0
      %347 = vperm.xlu0 %346, %v273
      %v348 = vpop.permute.xlu0 %347
      %351 = vset.pattern.permute.xlu0 0
      %352 = vperm.xlu0 %351, %v274
      %v353 = vpop.permute.xlu0 %352
      %v371 = vunpack.c.l.b16 %v243
      %v372 = vunpack.c.l.b16 %v244
      %v373 = vunpack.c.l.b16 %v245
      %v374 = vunpack.c.l.b16 %v246
      %v375 = vunpack.c.l.b16 %v247
      %v376 = vunpack.c.l.b16 %v248
      %v377 = vunpack.c.l.b16 %v249
      %v378 = vunpack.c.l.b16 %v250
      %v379 = vunpack.c.l.b16 %v251
      %v380 = vunpack.c.l.b16 %v252
      %v381 = vunpack.c.l.b16 %v253
      %v382 = vunpack.c.l.b16 %v254
      %v383 = vunpack.c.l.b16 %v255
      %v384 = vunpack.c.l.b16 %v256
      %v385 = vunpack.c.l.b16 %v257
      %v386 = vunpack.c.l.b16 %v258
      %v387 = vpack.c.b16 %v372, %v371
      %v388 = vpack.c.b16 %v374, %v373
      %v389 = vpack.c.b16 %v376, %v375
      %v390 = vpack.c.b16 %v378, %v377
      %v391 = vpack.c.b16 %v380, %v379
      %v392 = vpack.c.b16 %v382, %v381
      %v393 = vpack.c.b16 %v384, %v383
      %v394 = vpack.c.b16 %v386, %v385
      %vm395 = vcmask 23552
      %v397 = vsel %vm395, %v387, 0
      %v400 = vsel %vm395, %v388, 0
      %v403 = vsel %vm395, %v389, 0
      %v406 = vsel %vm395, %v390, 0
      %v409 = vsel %vm395, %v391, 0
      %v412 = vsel %vm395, %v392, 0
      %v415 = vsel %vm395, %v393, 0
      %v418 = vsel %vm395, %v394, 0
      %vm420 = vcmask 1040384
      %vm421 = vcmask 1041408
      %v422 = vsel %vm420, 4294967295, 65535
      %v423 = vsel %vm421, %v422, 0
      %v425 = vand.u32 %v241, %v423
      %v428 = vand.u32 %v242, %v423
      %430 = vmatprep.subr.bf16.mxu0 %v428
      %431 = vmatpush1.bf16.msra.mxu0 %v425
      %432 = vmatprep.subr.bf16.mxu0 0
      %433 = vmatpush1.bf16.msra.mxu0 0
      %434 = vmatprep.subr.bf16.mxu0 0
      %435 = vmatpush1.bf16.msra.mxu0 0
      %436 = vmatprep.subr.bf16.mxu0 0
      %437 = vmatpush1.bf16.msra.mxu0 0
      %438 = vmatprep.subr.bf16.mxu0 0
      %439 = vmatpush1.bf16.msra.mxu0 0
      %440 = vmatprep.subr.bf16.mxu0 0
      %441 = vmatpush1.bf16.msra.mxu0 0
      %442 = vmatprep.subr.bf16.mxu0 0
      %443 = vmatpush1.bf16.msra.mxu0 0
      %444 = vmatprep.subr.bf16.mxu0 0
      %445 = vmatpush1.bf16.msra.mxu0 0
      %446 = vmatprep.subr.bf16.mxu0 0
      %447 = vmatpush1.bf16.msra.mxu0 0
      %448 = vmatprep.subr.bf16.mxu0 0
      %449 = vmatpush1.bf16.msra.mxu0 0
      %450 = vmatprep.subr.bf16.mxu0 0
      %451 = vmatpush1.bf16.msra.mxu0 0
      %452 = vmatprep.subr.bf16.mxu0 0
      %453 = vmatpush1.bf16.msra.mxu0 0
      %454 = vmatprep.subr.bf16.mxu0 0
      %455 = vmatpush1.bf16.msra.mxu0 0
      %456 = vmatprep.subr.bf16.mxu0 0
      %457 = vmatpush1.bf16.msra.mxu0 0
      %458 = vmatprep.subr.bf16.mxu0 0
      %459 = vmatpush1.bf16.msra.mxu0 0
      %460 = vmatprep.subr.bf16.mxu0 0
      %461 = vmatpush1.bf16.msra.mxu0 0
      %462 = vmatprep.mubr.bf16.mxu0 0
      %463 = vmatmul.mubr.bf16.gmra.mrb[0].mxu0 %v397
      %v464 = vpop.f32.mrb[0].mxu0
      %v465 = vadd.f32 %v278, %v464
      %v466 = vpop.f32.mrb[0].mxu0
      %v467 = vadd.f32 %v278, %v466
      %v468 = vpop.f32.mrb[0].mxu0
      %v469 = vadd.f32 %v283, %v468
      %v470 = vpop.f32.mrb[0].mxu0
      %v471 = vadd.f32 %v283, %v470
      %472 = vmatprep.mubr.bf16.mxu0 0
      %473 = vmatmul.mubr.bf16.gmra.mrb[0].mxu0 %v400
      %v474 = vpop.f32.mrb[0].mxu0
      %v475 = vadd.f32 %v288, %v474
      %v476 = vpop.f32.mrb[0].mxu0
      %v477 = vadd.f32 %v288, %v476
      %v478 = vpop.f32.mrb[0].mxu0
      %v479 = vadd.f32 %v293, %v478
      %v480 = vpop.f32.mrb[0].mxu0
      %v481 = vadd.f32 %v293, %v480
      %482 = vmatprep.mubr.bf16.mxu0 0
      %483 = vmatmul.mubr.bf16.gmra.mrb[0].mxu0 %v403
      %v484 = vpop.f32.mrb[0].mxu0
      %v485 = vadd.f32 %v298, %v484
      %v486 = vpop.f32.mrb[0].mxu0
      %v487 = vadd.f32 %v298, %v486
      %v488 = vpop.f32.mrb[0].mxu0
      %v489 = vadd.f32 %v303, %v488
      %v490 = vpop.f32.mrb[0].mxu0
      %v491 = vadd.f32 %v303, %v490
      %492 = vmatprep.mubr.bf16.mxu0 0
      %493 = vmatmul.mubr.bf16.gmra.mrb[0].mxu0 %v406
      %v494 = vpop.f32.mrb[0].mxu0
      %v495 = vadd.f32 %v308, %v494
      %v496 = vpop.f32.mrb[0].mxu0
      %v497 = vadd.f32 %v308, %v496
      %v498 = vpop.f32.mrb[0].mxu0
      %v499 = vadd.f32 %v313, %v498
      %v500 = vpop.f32.mrb[0].mxu0
      %v501 = vadd.f32 %v313, %v500
      %502 = vmatprep.mubr.bf16.mxu0 0
      %503 = vmatmul.mubr.bf16.gmra.mrb[0].mxu0 %v409
      %v504 = vpop.f32.mrb[0].mxu0
      %v505 = vadd.f32 %v318, %v504
      %v506 = vpop.f32.mrb[0].mxu0
      %v507 = vadd.f32 %v318, %v506
      %v508 = vpop.f32.mrb[0].mxu0
      %v509 = vadd.f32 %v323, %v508
      %v510 = vpop.f32.mrb[0].mxu0
      %v511 = vadd.f32 %v323, %v510
      %512 = vmatprep.mubr.bf16.mxu0 0
      %513 = vmatmul.mubr.bf16.gmra.mrb[0].mxu0 %v412
      %v514 = vpop.f32.mrb[0].mxu0
      %v515 = vadd.f32 %v328, %v514
      %v516 = vpop.f32.mrb[0].mxu0
      %v517 = vadd.f32 %v328, %v516
      %v518 = vpop.f32.mrb[0].mxu0
      %v519 = vadd.f32 %v333, %v518
      %v520 = vpop.f32.mrb[0].mxu0
      %v521 = vadd.f32 %v333, %v520
      %522 = vmatprep.mubr.bf16.mxu0 0
      %523 = vmatmul.mubr.bf16.gmra.mrb[0].mxu0 %v415
      %v524 = vpop.f32.mrb[0].mxu0
      %v525 = vadd.f32 %v338, %v524
      %v526 = vpop.f32.mrb[0].mxu0
      %v527 = vadd.f32 %v338, %v526
      %v528 = vpop.f32.mrb[0].mxu0
      %v529 = vadd.f32 %v343, %v528
      %v530 = vpop.f32.mrb[0].mxu0
      %v531 = vadd.f32 %v343, %v530
      %532 = vmatprep.mubr.bf16.mxu0 0
      %533 = vmatmul.mubr.bf16.gmra.mrb[0].mxu0 %v418
      %v534 = vpop.f32.mrb[0].mxu0
      %v535 = vadd.f32 %v348, %v534
      %v536 = vpop.f32.mrb[0].mxu0
      %v537 = vadd.f32 %v348, %v536
      %v538 = vpop.f32.mrb[0].mxu0
      %v539 = vadd.f32 %v353, %v538
      %v540 = vpop.f32.mrb[0].mxu0
      %v541 = vadd.f32 %v353, %v540
      %542 = vdwg.mxu0
      %vm543 = vcmp.gt.f32.partialorder %v465, 0.0
      %vm544 = vcmp.gt.f32.partialorder %v467, 0.0
      %vm545 = vcmp.gt.f32.partialorder %v469, 0.0
      %vm546 = vcmp.gt.f32.partialorder %v471, 0.0
      %vm547 = vcmp.gt.f32.partialorder %v475, 0.0
      %vm548 = vcmp.gt.f32.partialorder %v477, 0.0
      %vm549 = vcmp.gt.f32.partialorder %v479, 0.0
      %vm550 = vcmp.gt.f32.partialorder %v481, 0.0
      %vm551 = vcmp.gt.f32.partialorder %v485, 0.0
      %vm552 = vcmp.gt.f32.partialorder %v487, 0.0
      %vm553 = vcmp.gt.f32.partialorder %v489, 0.0
      %vm554 = vcmp.gt.f32.partialorder %v491, 0.0
      %vm555 = vcmp.gt.f32.partialorder %v495, 0.0
      %vm556 = vcmp.gt.f32.partialorder %v497, 0.0
      %vm557 = vcmp.gt.f32.partialorder %v499, 0.0
      %vm558 = vcmp.gt.f32.partialorder %v501, 0.0
      %vm559 = vcmp.gt.f32.partialorder %v505, 0.0
      %vm560 = vcmp.gt.f32.partialorder %v507, 0.0
      %vm561 = vcmp.gt.f32.partialorder %v509, 0.0
      %vm562 = vcmp.gt.f32.partialorder %v511, 0.0
      %vm563 = vcmp.gt.f32.partialorder %v515, 0.0
      %vm564 = vcmp.gt.f32.partialorder %v517, 0.0
      %vm565 = vcmp.gt.f32.partialorder %v519, 0.0
      %vm566 = vcmp.gt.f32.partialorder %v521, 0.0
      %vm567 = vcmp.gt.f32.partialorder %v525, 0.0
      %vm568 = vcmp.gt.f32.partialorder %v527, 0.0
      %vm569 = vcmp.gt.f32.partialorder %v529, 0.0
      %vm570 = vcmp.gt.f32.partialorder %v531, 0.0
      %vm571 = vcmp.gt.f32.partialorder %v535, 0.0
      %vm572 = vcmp.gt.f32.partialorder %v537, 0.0
      %vm573 = vcmp.gt.f32.partialorder %v539, 0.0
      %vm574 = vcmp.gt.f32.partialorder %v541, 0.0
      %v575 = vmul.f32 %v465, 0.2
      %v576 = vmul.f32 %v467, 0.2
      %v577 = vmul.f32 %v469, 0.2
      %v578 = vmul.f32 %v471, 0.2
      %v579 = vmul.f32 %v475, 0.2
      %v580 = vmul.f32 %v477, 0.2
      %v581 = vmul.f32 %v479, 0.2
      %v582 = vmul.f32 %v481, 0.2
      %v583 = vmul.f32 %v485, 0.2
      %v584 = vmul.f32 %v487, 0.2
      %v585 = vmul.f32 %v489, 0.2
      %v586 = vmul.f32 %v491, 0.2
      %v587 = vmul.f32 %v495, 0.2
      %v588 = vmul.f32 %v497, 0.2
      %v589 = vmul.f32 %v499, 0.2
      %v590 = vmul.f32 %v501, 0.2
      %v591 = vmul.f32 %v505, 0.2
      %v592 = vmul.f32 %v507, 0.2
      %v593 = vmul.f32 %v509, 0.2
      %v594 = vmul.f32 %v511, 0.2
      %v595 = vmul.f32 %v515, 0.2
      %v596 = vmul.f32 %v517, 0.2
      %v597 = vmul.f32 %v519, 0.2
      %v598 = vmul.f32 %v521, 0.2
      %v599 = vmul.f32 %v525, 0.2
      %v600 = vmul.f32 %v527, 0.2
      %v601 = vmul.f32 %v529, 0.2
      %v602 = vmul.f32 %v531, 0.2
      %v603 = vmul.f32 %v535, 0.2
      %v604 = vmul.f32 %v537, 0.2
      %v605 = vmul.f32 %v539, 0.2
      %v606 = vmul.f32 %v541, 0.2
      %v607 = vsel %vm543, %v465, %v575
      %v608 = vsel %vm544, %v467, %v576
      %v609 = vsel %vm545, %v469, %v577
      %v610 = vsel %vm546, %v471, %v578
      %v611 = vsel %vm547, %v475, %v579
      %v612 = vsel %vm548, %v477, %v580
      %v613 = vsel %vm549, %v479, %v581
      %v614 = vsel %vm550, %v481, %v582
      %v615 = vsel %vm551, %v485, %v583
      %v616 = vsel %vm552, %v487, %v584
      %v617 = vsel %vm553, %v489, %v585
      %v618 = vsel %vm554, %v491, %v586
      %v619 = vsel %vm555, %v495, %v587
      %v620 = vsel %vm556, %v497, %v588
      %v621 = vsel %vm557, %v499, %v589
      %v622 = vsel %vm558, %v501, %v590
      %v623 = vsel %vm559, %v505, %v591
      %v624 = vsel %vm560, %v507, %v592
      %v625 = vsel %vm561, %v509, %v593
      %v626 = vsel %vm562, %v511, %v594
      %v627 = vsel %vm563, %v515, %v595
      %v628 = vsel %vm564, %v517, %v596
      %v629 = vsel %vm565, %v519, %v597
      %v630 = vsel %vm566, %v521, %v598
      %v631 = vsel %vm567, %v525, %v599
      %v632 = vsel %vm568, %v527, %v600
      %v633 = vsel %vm569, %v529, %v601
      %v634 = vsel %vm570, %v531, %v602
      %v635 = vsel %vm571, %v535, %v603
      %v636 = vsel %vm572, %v537, %v604
      %v637 = vsel %vm573, %v539, %v605
      %v638 = vsel %vm574, %v541, %v606
      %v639 = vld [vmem:[%s3] sm:$0xf]
      %v640 = vld [vmem:[%s3 + $0x4] sm:$0xf]
      %v641 = vld [vmem:[%s3 + $0x8] sm:$0xf]
      %v642 = vld [vmem:[%s3 + $0xc] sm:$0xf]
      %v643 = vld [vmem:[%s3 + $0x10] sm:$0xf]
      %v644 = vld [vmem:[%s3 + $0x14] sm:$0xf]
      %v645 = vld [vmem:[%s3 + $0x18] sm:$0xf]
      %v646 = vld [vmem:[%s3 + $0x1c] sm:$0xf]
      %v647 = vld [vmem:[%s3 + $0x20] sm:$0xf]
      %v648 = vld [vmem:[%s3 + $0x24] sm:$0xf]
      %v649 = vld [vmem:[%s3 + $0x28] sm:$0xf]
      %v650 = vld [vmem:[%s3 + $0x2c] sm:$0xf]
      %v651 = vld [vmem:[%s3 + $0x30] sm:$0xf]
      %v652 = vld [vmem:[%s3 + $0x34] sm:$0xf]
      %v653 = vld [vmem:[%s3 + $0x38] sm:$0xf]
      %v654 = vld [vmem:[%s3 + $0x3c] sm:$0xf]
      %v655 = vpack.c.bf16 %v609, %v607
      %v656 = vpack.c.bf16 %v610, %v608
      %v657 = vpack.c.bf16 %v613, %v611
      %v658 = vpack.c.bf16 %v614, %v612
      %v659 = vpack.c.bf16 %v617, %v615
      %v660 = vpack.c.bf16 %v618, %v616
      %v661 = vpack.c.bf16 %v621, %v619
      %v662 = vpack.c.bf16 %v622, %v620
      %v663 = vpack.c.bf16 %v625, %v623
      %v664 = vpack.c.bf16 %v626, %v624
      %v665 = vpack.c.bf16 %v629, %v627
      %v666 = vpack.c.bf16 %v630, %v628
      %v667 = vpack.c.bf16 %v633, %v631
      %v668 = vpack.c.bf16 %v634, %v632
      %v669 = vpack.c.bf16 %v637, %v635
      %v670 = vpack.c.bf16 %v638, %v636
      %v687 = vunpack.c.l.b16 %v639
      %v688 = vunpack.c.l.b16 %v640
      %v689 = vunpack.c.l.b16 %v641
      %v690 = vunpack.c.l.b16 %v642
      %v691 = vunpack.c.l.b16 %v643
      %v692 = vunpack.c.l.b16 %v644
      %v693 = vunpack.c.l.b16 %v645
      %v694 = vunpack.c.l.b16 %v646
      %v695 = vunpack.c.l.b16 %v647
      %v696 = vunpack.c.l.b16 %v648
      %v697 = vunpack.c.l.b16 %v649
      %v698 = vunpack.c.l.b16 %v650
      %v699 = vunpack.c.l.b16 %v651
      %v700 = vunpack.c.l.b16 %v652
      %v701 = vunpack.c.l.b16 %v653
      %v702 = vunpack.c.l.b16 %v654
      %v703 = vpack.c.b16 %v688, %v687
      %v704 = vpack.c.b16 %v690, %v689
      %v705 = vpack.c.b16 %v692, %v691
      %v706 = vpack.c.b16 %v694, %v693
      %v707 = vpack.c.b16 %v696, %v695
      %v708 = vpack.c.b16 %v698, %v697
      %v709 = vpack.c.b16 %v700, %v699
      %v710 = vpack.c.b16 %v702, %v701
      %719 = vmatprep.subr.bf16.mxu0 %v656
      %720 = vmatpush1.bf16.msra.mxu0 %v655
      %721 = vmatprep.subr.bf16.mxu0 %v658
      %722 = vmatpush1.bf16.msra.mxu0 %v657
      %723 = vmatprep.subr.bf16.mxu0 %v660
      %724 = vmatpush1.bf16.msra.mxu0 %v659
      %725 = vmatprep.subr.bf16.mxu0 %v662
      %726 = vmatpush1.bf16.msra.mxu0 %v661
      %727 = vmatprep.subr.bf16.mxu0 %v664
      %728 = vmatpush1.bf16.msra.mxu0 %v663
      %729 = vmatprep.subr.bf16.mxu0 %v666
      %730 = vmatpush1.bf16.msra.mxu0 %v665
      %731 = vmatprep.subr.bf16.mxu0 %v668
      %732 = vmatpush1.bf16.msra.mxu0 %v667
      %733 = vmatprep.subr.bf16.mxu0 %v670
      %734 = vmatpush1.bf16.msra.mxu0 %v669
      %735 = vmatprep.subr.bf16.mxu0 0
      %736 = vmatpush1.bf16.msra.mxu0 0
      %737 = vmatprep.subr.bf16.mxu0 0
      %738 = vmatpush1.bf16.msra.mxu0 0
      %739 = vmatprep.subr.bf16.mxu0 0
      %740 = vmatpush1.bf16.msra.mxu0 0
      %741 = vmatprep.subr.bf16.mxu0 0
      %742 = vmatpush1.bf16.msra.mxu0 0
      %743 = vmatprep.subr.bf16.mxu0 0
      %744 = vmatpush1.bf16.msra.mxu0 0
      %745 = vmatprep.subr.bf16.mxu0 0
      %746 = vmatpush1.bf16.msra.mxu0 0
      %747 = vmatprep.subr.bf16.mxu0 0
      %748 = vmatpush1.bf16.msra.mxu0 0
      %749 = vmatprep.subr.bf16.mxu0 0
      %750 = vmatpush1.bf16.msra.mxu0 0
      %751 = vmatprep.mubr.bf16.mxu0 0
      %752 = vmatmul.mubr.bf16.gmra.mrb[0].mxu0 %v703
      %v753 = vpop.f32.mrb[0].mxu0
      %v754 = vadd.f32 0.0, %v753
      %v755 = vpop.f32.mrb[0].mxu0
      %v756 = vadd.f32 0.0, %v755
      %v757 = vpop.f32.mrb[0].mxu0
      %v758 = vadd.f32 0.0, %v757
      %v759 = vpop.f32.mrb[0].mxu0
      %v760 = vadd.f32 0.0, %v759
      %761 = vmatprep.mubr.bf16.mxu0 0
      %762 = vmatmul.mubr.bf16.gmra.mrb[0].mxu0 %v704
      %v763 = vpop.f32.mrb[0].mxu0
      %v764 = vadd.f32 0.0, %v763
      %v765 = vpop.f32.mrb[0].mxu0
      %v766 = vadd.f32 0.0, %v765
      %v767 = vpop.f32.mrb[0].mxu0
      %v768 = vadd.f32 0.0, %v767
      %v769 = vpop.f32.mrb[0].mxu0
      %v770 = vadd.f32 0.0, %v769
      %771 = vmatprep.mubr.bf16.mxu0 0
      %772 = vmatmul.mubr.bf16.gmra.mrb[0].mxu0 %v705
      %v773 = vpop.f32.mrb[0].mxu0
      %v774 = vadd.f32 0.0, %v773
      %v775 = vpop.f32.mrb[0].mxu0
      %v776 = vadd.f32 0.0, %v775
      %v777 = vpop.f32.mrb[0].mxu0
      %v778 = vadd.f32 0.0, %v777
      %v779 = vpop.f32.mrb[0].mxu0
      %v780 = vadd.f32 0.0, %v779
      %781 = vmatprep.mubr.bf16.mxu0 0
      %782 = vmatmul.mubr.bf16.gmra.mrb[0].mxu0 %v706
      %v783 = vpop.f32.mrb[0].mxu0
      %v784 = vadd.f32 0.0, %v783
      %v785 = vpop.f32.mrb[0].mxu0
      %v786 = vadd.f32 0.0, %v785
      %v787 = vpop.f32.mrb[0].mxu0
      %v788 = vadd.f32 0.0, %v787
      %v789 = vpop.f32.mrb[0].mxu0
      %v790 = vadd.f32 0.0, %v789
      %791 = vmatprep.mubr.bf16.mxu0 0
      %792 = vmatmul.mubr.bf16.gmra.mrb[0].mxu0 %v707
      %v793 = vpop.f32.mrb[0].mxu0
      %v794 = vadd.f32 0.0, %v793
      %v795 = vpop.f32.mrb[0].mxu0
      %v796 = vadd.f32 0.0, %v795
      %v797 = vpop.f32.mrb[0].mxu0
      %v798 = vadd.f32 0.0, %v797
      %v799 = vpop.f32.mrb[0].mxu0
      %v800 = vadd.f32 0.0, %v799
      %801 = vmatprep.mubr.bf16.mxu0 0
      %802 = vmatmul.mubr.bf16.gmra.mrb[0].mxu0 %v708
      %v803 = vpop.f32.mrb[0].mxu0
      %v804 = vadd.f32 0.0, %v803
      %v805 = vpop.f32.mrb[0].mxu0
      %v806 = vadd.f32 0.0, %v805
      %v807 = vpop.f32.mrb[0].mxu0
      %v808 = vadd.f32 0.0, %v807
      %v809 = vpop.f32.mrb[0].mxu0
      %v810 = vadd.f32 0.0, %v809
      %811 = vmatprep.mubr.bf16.mxu0 0
      %812 = vmatmul.mubr.bf16.gmra.mrb[0].mxu0 %v709
      %v813 = vpop.f32.mrb[0].mxu0
      %v814 = vadd.f32 0.0, %v813
      %v815 = vpop.f32.mrb[0].mxu0
      %v816 = vadd.f32 0.0, %v815
      %v817 = vpop.f32.mrb[0].mxu0
      %v818 = vadd.f32 0.0, %v817
      %v819 = vpop.f32.mrb[0].mxu0
      %v820 = vadd.f32 0.0, %v819
      %821 = vmatprep.mubr.bf16.mxu0 0
      %822 = vmatmul.mubr.bf16.gmra.mrb[0].mxu0 %v710
      %v823 = vpop.f32.mrb[0].mxu0
      %v824 = vadd.f32 0.0, %v823
      %v825 = vpop.f32.mrb[0].mxu0
      %v826 = vadd.f32 0.0, %v825
      %v827 = vpop.f32.mrb[0].mxu0
      %v828 = vadd.f32 0.0, %v827
      %v829 = vpop.f32.mrb[0].mxu0
      %v830 = vadd.f32 0.0, %v829
      %831 = vdwg.mxu0
      %v832 = vlaneseq
      %v833 = vand.u32 %v832, 127
      %v834 = vadd.s32 %v833, 128
      %s835 = smul.u32 %s20, 256
      %v836 = vstv %s835
      %v837 = vadd.s32 %v833, %v836
      %v838 = vadd.s32 %v834, %v836
      %vm839 = vcmp.lt.s32.totalorder %v837, 256
      %vm840 = vcmp.lt.s32.totalorder %v838, 256
      %v841 = vsel %vm839, 1, 0
      %v842 = vsel %vm840, 1, 0
      %v843 = vcvt.s32.f32 %v841
      %v844 = vcvt.s32.f32 %v842
      %v845 = vmul.f32 %v754, %v843
      %v846 = vmul.f32 %v756, %v844
      %v847 = vmul.f32 %v758, %v843
      %v848 = vmul.f32 %v760, %v844
      %v849 = vmul.f32 %v764, %v843
      %v850 = vmul.f32 %v766, %v844
      %v851 = vmul.f32 %v768, %v843
      %v852 = vmul.f32 %v770, %v844
      %v853 = vmul.f32 %v774, %v843
      %v854 = vmul.f32 %v776, %v844
      %v855 = vmul.f32 %v778, %v843
      %v856 = vmul.f32 %v780, %v844
      %v857 = vmul.f32 %v784, %v843
      %v858 = vmul.f32 %v786, %v844
      %v859 = vmul.f32 %v788, %v843
      %v860 = vmul.f32 %v790, %v844
      %v861 = vmul.f32 %v794, %v843
      %v862 = vmul.f32 %v796, %v844
      %v863 = vmul.f32 %v798, %v843
      %v864 = vmul.f32 %v800, %v844
      %v865 = vmul.f32 %v804, %v843
      %v866 = vmul.f32 %v806, %v844
      %v867 = vmul.f32 %v808, %v843
      %v868 = vmul.f32 %v810, %v844
      %v869 = vmul.f32 %v814, %v843
      %v870 = vmul.f32 %v816, %v844
      %v871 = vmul.f32 %v818, %v843
      %v872 = vmul.f32 %v820, %v844
      %v873 = vmul.f32 %v824, %v843
      %v874 = vmul.f32 %v826, %v844
      %v875 = vmul.f32 %v828, %v843
      %v876 = vmul.f32 %v830, %v844
      %v877 = vadd.f32 %v845, %v846
      %878 = vadd.xlane.f32.xlu0 %v877
      %v879 = vpop.xlane.xlu0 %878
      %v880 = vadd.f32 %v847, %v848
      %881 = vadd.xlane.f32.xlu0 %v880
      %v882 = vpop.xlane.xlu0 %881
      %v883 = vadd.f32 %v849, %v850
      %884 = vadd.xlane.f32.xlu0 %v883
      %v885 = vpop.xlane.xlu0 %884
      %v886 = vadd.f32 %v851, %v852
      %887 = vadd.xlane.f32.xlu0 %v886
      %v888 = vpop.xlane.xlu0 %887
      %v889 = vadd.f32 %v853, %v854
      %890 = vadd.xlane.f32.xlu0 %v889
      %v891 = vpop.xlane.xlu0 %890
      %v892 = vadd.f32 %v855, %v856
      %893 = vadd.xlane.f32.xlu0 %v892
      %v894 = vpop.xlane.xlu0 %893
      %v895 = vadd.f32 %v857, %v858
      %896 = vadd.xlane.f32.xlu0 %v895
      %v897 = vpop.xlane.xlu0 %896
      %v898 = vadd.f32 %v859, %v860
      %899 = vadd.xlane.f32.xlu0 %v898
      %v900 = vpop.xlane.xlu0 %899
      %v901 = vadd.f32 %v861, %v862
      %902 = vadd.xlane.f32.xlu0 %v901
      %v903 = vpop.xlane.xlu0 %902
      %v904 = vadd.f32 %v863, %v864
      %905 = vadd.xlane.f32.xlu0 %v904
      %v906 = vpop.xlane.xlu0 %905
      %v907 = vadd.f32 %v865, %v866
      %908 = vadd.xlane.f32.xlu0 %v907
      %v909 = vpop.xlane.xlu0 %908
      %v910 = vadd.f32 %v867, %v868
      %911 = vadd.xlane.f32.xlu0 %v910
      %v912 = vpop.xlane.xlu0 %911
      %v913 = vadd.f32 %v869, %v870
      %914 = vadd.xlane.f32.xlu0 %v913
      %v915 = vpop.xlane.xlu0 %914
      %v916 = vadd.f32 %v871, %v872
      %917 = vadd.xlane.f32.xlu0 %v916
      %v918 = vpop.xlane.xlu0 %917
      %v919 = vadd.f32 %v873, %v874
      %920 = vadd.xlane.f32.xlu0 %v919
      %v921 = vpop.xlane.xlu0 %920
      %v922 = vadd.f32 %v875, %v876
      %923 = vadd.xlane.f32.xlu0 %v922
      %v924 = vpop.xlane.xlu0 %923
      %vm925 = vcmask 7168
      %926 = vst.msk [vmem:[%s235] sm:$0xff] %vm925, %v879
      %927 = vst.msk [vmem:[%s235 + $0x8] sm:$0xff] %vm925, %v882
      %928 = vst.msk [vmem:[%s235 + $0x10] sm:$0xff] %vm925, %v885
      %929 = vst.msk [vmem:[%s235 + $0x18] sm:$0xff] %vm925, %v888
      %930 = vst.msk [vmem:[%s235 + $0x20] sm:$0xff] %vm925, %v891
      %931 = vst.msk [vmem:[%s235 + $0x28] sm:$0xff] %vm925, %v894
      %932 = vst.msk [vmem:[%s235 + $0x30] sm:$0xff] %vm925, %v897
      %933 = vst.msk [vmem:[%s235 + $0x38] sm:$0xff] %vm925, %v900
      %934 = vst.msk [vmem:[%s235 + $0x40] sm:$0xff] %vm925, %v903
      %935 = vst.msk [vmem:[%s235 + $0x48] sm:$0xff] %vm925, %v906
      %936 = vst.msk [vmem:[%s235 + $0x50] sm:$0xff] %vm925, %v909
      %937 = vst.msk [vmem:[%s235 + $0x58] sm:$0xff] %vm925, %v912
      %938 = vst.msk [vmem:[%s235 + $0x60] sm:$0xff] %vm925, %v915
      %939 = vst.msk [vmem:[%s235 + $0x68] sm:$0xff] %vm925, %v918
      %940 = vst.msk [vmem:[%s235 + $0x70] sm:$0xff] %vm925, %v921
      %941 = vst.msk [vmem:[%s235 + $0x78] sm:$0xff] %vm925, %v924
      %v942 = vmul.f32 %v845, %v754
      %v943 = vmul.f32 %v846, %v756
      %v944 = vmul.f32 %v847, %v758
      %v945 = vmul.f32 %v848, %v760
      %v946 = vmul.f32 %v849, %v764
      %v947 = vmul.f32 %v850, %v766
      %v948 = vmul.f32 %v851, %v768
      %v949 = vmul.f32 %v852, %v770
      %v950 = vmul.f32 %v853, %v774
      %v951 = vmul.f32 %v854, %v776
      %v952 = vmul.f32 %v855, %v778
      %v953 = vmul.f32 %v856, %v780
      %v954 = vmul.f32 %v857, %v784
      %v955 = vmul.f32 %v858, %v786
      %v956 = vmul.f32 %v859, %v788
      %v957 = vmul.f32 %v860, %v790
      %v958 = vmul.f32 %v861, %v794
      %v959 = vmul.f32 %v862, %v796
      %v960 = vmul.f32 %v863, %v798
      %v961 = vmul.f32 %v864, %v800
      %v962 = vmul.f32 %v865, %v804
      %v963 = vmul.f32 %v866, %v806
      %v964 = vmul.f32 %v867, %v808
      %v965 = vmul.f32 %v868, %v810
      %v966 = vmul.f32 %v869, %v814
      %v967 = vmul.f32 %v870, %v816
      %v968 = vmul.f32 %v871, %v818
      %v969 = vmul.f32 %v872, %v820
      %v970 = vmul.f32 %v873, %v824
      %v971 = vmul.f32 %v874, %v826
      %v972 = vmul.f32 %v875, %v828
      %v973 = vmul.f32 %v876, %v830
      %v974 = vadd.f32 %v942, %v943
      %975 = vadd.xlane.f32.xlu0 %v974
      %v976 = vpop.xlane.xlu0 %975
      %v977 = vadd.f32 %v944, %v945
      %978 = vadd.xlane.f32.xlu0 %v977
      %v979 = vpop.xlane.xlu0 %978
      %v980 = vadd.f32 %v946, %v947
      %981 = vadd.xlane.f32.xlu0 %v980
      %v982 = vpop.xlane.xlu0 %981
      %v983 = vadd.f32 %v948, %v949
      %984 = vadd.xlane.f32.xlu0 %v983
      %v985 = vpop.xlane.xlu0 %984
      %v986 = vadd.f32 %v950, %v951
      %987 = vadd.xlane.f32.xlu0 %v986
      %v988 = vpop.xlane.xlu0 %987
      %v989 = vadd.f32 %v952, %v953
      %990 = vadd.xlane.f32.xlu0 %v989
      %v991 = vpop.xlane.xlu0 %990
      %v992 = vadd.f32 %v954, %v955
      %993 = vadd.xlane.f32.xlu0 %v992
      %v994 = vpop.xlane.xlu0 %993
      %v995 = vadd.f32 %v956, %v957
      %996 = vadd.xlane.f32.xlu0 %v995
      %v997 = vpop.xlane.xlu0 %996
      %v998 = vadd.f32 %v958, %v959
      %999 = vadd.xlane.f32.xlu0 %v998
      %v1000 = vpop.xlane.xlu0 %999
      %v1001 = vadd.f32 %v960, %v961
      %1002 = vadd.xlane.f32.xlu0 %v1001
      %v1003 = vpop.xlane.xlu0 %1002
      %v1004 = vadd.f32 %v962, %v963
      %1005 = vadd.xlane.f32.xlu0 %v1004
      %v1006 = vpop.xlane.xlu0 %1005
      %v1007 = vadd.f32 %v964, %v965
      %1008 = vadd.xlane.f32.xlu0 %v1007
      %v1009 = vpop.xlane.xlu0 %1008
      %v1010 = vadd.f32 %v966, %v967
      %1011 = vadd.xlane.f32.xlu0 %v1010
      %v1012 = vpop.xlane.xlu0 %1011
      %v1013 = vadd.f32 %v968, %v969
      %1014 = vadd.xlane.f32.xlu0 %v1013
      %v1015 = vpop.xlane.xlu0 %1014
      %v1016 = vadd.f32 %v970, %v971
      %1017 = vadd.xlane.f32.xlu0 %v1016
      %v1018 = vpop.xlane.xlu0 %1017
      %v1019 = vadd.f32 %v972, %v973
      %1020 = vadd.xlane.f32.xlu0 %v1019
      %v1021 = vpop.xlane.xlu0 %1020
      %vm1022 = vcmask 15368
      %1023 = vst.msk [vmem:[%s235] sm:$0xff] %vm1022, %v976
      %1024 = vst.msk [vmem:[%s235 + $0x8] sm:$0xff] %vm1022, %v979
      %1025 = vst.msk [vmem:[%s235 + $0x10] sm:$0xff] %vm1022, %v982
      %1026 = vst.msk [vmem:[%s235 + $0x18] sm:$0xff] %vm1022, %v985
      %1027 = vst.msk [vmem:[%s235 + $0x20] sm:$0xff] %vm1022, %v988
      %1028 = vst.msk [vmem:[%s235 + $0x28] sm:$0xff] %vm1022, %v991
      %1029 = vst.msk [vmem:[%s235 + $0x30] sm:$0xff] %vm1022, %v994
      %1030 = vst.msk [vmem:[%s235 + $0x38] sm:$0xff] %vm1022, %v997
      %1031 = vst.msk [vmem:[%s235 + $0x40] sm:$0xff] %vm1022, %v1000
      %1032 = vst.msk [vmem:[%s235 + $0x48] sm:$0xff] %vm1022, %v1003
      %1033 = vst.msk [vmem:[%s235 + $0x50] sm:$0xff] %vm1022, %v1006
      %1034 = vst.msk [vmem:[%s235 + $0x58] sm:$0xff] %vm1022, %v1009
      %1035 = vst.msk [vmem:[%s235 + $0x60] sm:$0xff] %vm1022, %v1012
      %1036 = vst.msk [vmem:[%s235 + $0x68] sm:$0xff] %vm1022, %v1015
      %1037 = vst.msk [vmem:[%s235 + $0x70] sm:$0xff] %vm1022, %v1018
      %1038 = vst.msk [vmem:[%s235 + $0x78] sm:$0xff] %vm1022, %v1021
      %p1039 = scmp.lt.s32.totalorder %s19, 1
      %s1040 = scalar_select %p1039, %s19, 1
      %p1041 = scmp.lt.s32.totalorder %s20, 0
      %s1042 = scalar_select %p1041, %s20, 0
      %s1043 = smul.addr %s1042, 16
      %s1044 = smul.addr %s1040, 16
      %s1045 = sadd.s32 %s1043, %s1044
      %s1046 = smul.addr %s1045, 8
      %s1047 = scalar_lea.vmem %s4, %s1046
      // Predicated region
      $region37: #{tpu_custom_call.1} parent=35 // pred_check
        %p1048 = pneg %p138
      $region38: #{tpu_custom_call.1} parent=35 // pred_check_branch
        %1050 = sbr.rel (%p1048) target = $region40
      $region39: #{tpu_custom_call.1} parent=35 // pred_region
        _
      $region40: #{tpu_custom_call.1} parent=35 // pred_fallthru
        _
    $region36: #{tpu_custom_call.1} parent=5 // pred_fallthru
      _
    %p1051 = scmp.le.s32.totalorder 2, %s10
    // Predicated region
    $region41: #{tpu_custom_call.1} parent=5 // pred_check
      %p1052 = pneg %p1051
    $region42: #{tpu_custom_call.1} parent=5 // pred_check_branch
      %1054 = sbr.rel (%p1052) target = $region44
    $region43: #{tpu_custom_call.1} parent=5 // pred_region
      %s1055 = ssub.s32 %s10, 2
      // Predicated region
      $region45: #{tpu_custom_call.1} parent=43 // pred_check
        %p1056 = pneg %p144
      $region46: #{tpu_custom_call.1} parent=43 // pred_check_branch
        %1058 = sbr.rel (%p1056) target = $region48
      $region47: #{tpu_custom_call.1} parent=43 // pred_region
        %p1059 = scmp.lt.s32.totalorder %s21, 1
        %s1060 = scalar_select %p1059, %s21, 1
        %p1061 = scmp.lt.s32.totalorder %s22, 0
        %s1062 = scalar_select %p1061, %s22, 0
        %s1063 = smul.addr %s1062, 16
        %s1064 = smul.addr %s1060, 16
        %s1065 = sadd.s32 %s1063, %s1064
        %s1066 = smul.addr %s1065, 8
        %s1067 = scalar_lea.vmem %s4, %s1066
      $region48: #{tpu_custom_call.1} parent=43 // pred_fallthru
        _
    $region44: #{tpu_custom_call.1} parent=5 // pred_fallthru
      _
  $region6: #{tpu_custom_call.1} parent=0 // loop_footer
    %s14 = sadd.s32 1, %s10
  $region7: #{tpu_custom_call.1} parent=0 // loop_footer_branch
    %9 = sbr.rel target = $region3
  $region8: #{tpu_custom_call.1} parent=0 // loop_exit
    _

</llo_original>
